<compile_context>
chip_gen: v7x
topology: tpu7x:2x2x1
jax: 0.10.0
libtpu: 0.0.40
codegen_flags: <defaults>
</compile_context>

<pallas_src>
import jax
import jax.numpy as jnp
from jax.experimental import pallas as pl
from jax.experimental.pallas import tpu as pltpu

IN_DIM = 6
HID_DIM = 10
OUT_DIM = 2

PACK = 64                      # samples packed per row (PACK * OUT_DIM == 128 lanes)
PACKED_IN = PACK * IN_DIM      # 384  (= 3 * 128)
PACKED_HID = PACK * HID_DIM    # 640  (= 5 * 128)
PACKED_OUT = PACK * OUT_DIM    # 128  (= 1 * 128, lane-dense output)


def _round_up(n, m):
    return ((n + m - 1) // m) * m


def mlp_kernel(x_ref, w1_ref, b1_ref, w2_ref, b2_ref, o_ref):
    # One (tile_r, 384) packed block of x; packed weights are VMEM-resident.
    x = x_ref[...]                                                     # (TR, 384)
    h = jnp.dot(x, w1_ref[...],
                preferred_element_type=jnp.float32) + b1_ref[...]      # (TR, 640)
    h = jnp.maximum(h, 0.0)                                            # ReLU on VPU
    y = jnp.dot(h, w2_ref[...],
                preferred_element_type=jnp.float32) + b2_ref[...]      # (TR, 128)
    o_ref[...] = y.astype(o_ref.dtype)                                 # lane-dense store


def simple_nn_forward(x, w1, b1, w2, b2, *, rows_per_tile=64):
    """Forward pass of SimpleNN. x: (B, 6) f32 -> (B, 2) f32.

    rows_per_tile = packed rows per grid step (1 packed row = 64 samples).
    Must be a multiple of 8 (sublane alignment). Default 64 -> 4096 samples
    per step, ~96 KiB of x per buffer.
    """
    assert x.ndim == 2 and x.shape[1] == IN_DIM
    assert rows_per_tile % 8 == 0 and rows_per_tile > 0
    B = x.shape[0]

    # Packed-row count, padded to a sublane-aligned / tile-aligned value.
    r_needed = -(-B // PACK)                       # ceil(B / PACK)
    if r_needed <= rows_per_tile:
        tile_r = _round_up(r_needed, 8)            # single step, sublane aligned
        r_pad = tile_r
    else:
        tile_r = rows_per_tile
        r_pad = _round_up(r_needed, tile_r)
    b_pad = r_pad * PACK

    if b_pad != B:
        x = jnp.pad(x, ((0, b_pad - B), (0, 0)))   # zero pad rows (independent)
    x_packed = x.reshape(r_pad, PACKED_IN)         # free row-major reshape

    # Block-diagonal packed weights: kron(I_64, W).  Sample s's features live
    # in columns [s*in : (s+1)*in], so the packed matmul applies W per sample.
    eye = jnp.eye(PACK, dtype=jnp.float32)
    w1_big = jnp.kron(eye, w1.astype(jnp.float32))                 # (384, 640)
    w2_big = jnp.kron(eye, w2.astype(jnp.float32))                 # (640, 128)
    b1_big = jnp.tile(b1.reshape(1, HID_DIM).astype(jnp.float32), (1, PACK))  # (1, 640)
    b2_big = jnp.tile(b2.reshape(1, OUT_DIM).astype(jnp.float32), (1, PACK))  # (1, 128)

    grid = (r_pad // tile_r,)

    f32 = 4
    cost = pl.CostEstimate(
        flops=2 * r_pad * (PACKED_IN * PACKED_HID + PACKED_HID * PACKED_OUT),
        transcendentals=0,
        bytes_accessed=(r_pad * (PACKED_IN + PACKED_OUT)
                        + w1_big.size + b1_big.size
                        + w2_big.size + b2_big.size) * f32,
    )

    out_packed = pl.pallas_call(
        mlp_kernel,
        out_shape=jax.ShapeDtypeStruct((r_pad, PACKED_OUT), jnp.float32),
        grid=grid,
        in_specs=[
            # Streamed, lane-dense packed batch blocks of x.
            pl.BlockSpec((tile_r, PACKED_IN), lambda i: (i, 0)),
            # Packed parameters: constant block index -> VMEM-resident.
            pl.BlockSpec((PACKED_IN, PACKED_HID), lambda i: (0, 0)),
            pl.BlockSpec((1, PACKED_HID), lambda i: (0, 0)),
            pl.BlockSpec((PACKED_HID, PACKED_OUT), lambda i: (0, 0)),
            pl.BlockSpec((1, PACKED_OUT), lambda i: (0, 0)),
        ],
        out_specs=pl.BlockSpec((tile_r, PACKED_OUT), lambda i: (i, 0)),
        compiler_params=pltpu.CompilerParams(
            dimension_semantics=("parallel",),   # v7x: shard batch over 2 TCs
        ),
        cost_estimate=cost,
    )(x_packed, w1_big, b1_big, w2_big, b2_big)

    # (r_pad, 128) -> (b_pad, 2) is another free row-major reshape.
    return out_packed.reshape(b_pad, OUT_DIM)[:B]


def init_params(key):
    # Mimic PyTorch nn.Linear default init: U(-1/sqrt(fan_in), 1/sqrt(fan_in)).
    k1, k2, k3, k4 = jax.random.split(key, 4)
    bound1 = 1.0 / jnp.sqrt(float(IN_DIM))
    bound2 = 1.0 / jnp.sqrt(float(HID_DIM))
    # Stored as (in, out) = transpose of PyTorch's (out, in) weight layout.
    w1 = jax.random.uniform(k1, (IN_DIM, HID_DIM), jnp.float32, -bound1, bound1)
    b1 = jax.random.uniform(k2, (1, HID_DIM), jnp.float32, -bound1, bound1)
    w2 = jax.random.uniform(k3, (HID_DIM, OUT_DIM), jnp.float32, -bound2, bound2)
    b2 = jax.random.uniform(k4, (1, OUT_DIM), jnp.float32, -bound2, bound2)
    return w1, b1, w2, b2


def _ref_forward(x, w1, b1, w2, b2):
    return jnp.maximum(x @ w1 + b1, 0.0) @ w2 + b2


if __name__ == "__main__":
    key = jax.random.PRNGKey(0)
    pkey, xkey1, xkey2, xkey3 = jax.random.split(key, 4)
    w1, b1, w2, b2 = init_params(pkey)

    # Small case (typical usage of the module): single grid step.
    B = 8
    x = jax.random.normal(xkey1, (B, IN_DIM), jnp.float32)
    out = simple_nn_forward(x, w1, b1, w2, b2)
    jax.block_until_ready(out)
    ref = _ref_forward(x, w1, b1, w2, b2)
    assert out.shape == (B, OUT_DIM)
    assert jnp.allclose(out, ref, atol=1e-5, rtol=1e-5)

    # Batch that is not a multiple of the pack factor: exercises padding.
    B2 = 300
    x2 = jax.random.normal(xkey2, (B2, IN_DIM), jnp.float32)
    out2 = simple_nn_forward(x2, w1, b1, w2, b2)
    jax.block_until_ready(out2)
    ref2 = _ref_forward(x2, w1, b1, w2, b2)
    assert out2.shape == (B2, OUT_DIM)
    assert jnp.allclose(out2, ref2, atol=1e-5, rtol=1e-5)

    # Larger ragged batch with a small tile: exercises the multi-step grid,
    # padding, and the VMEM-resident packed-weight path.
    B3 = 5000
    x3 = jax.random.normal(xkey3, (B3, IN_DIM), jnp.float32)
    out3 = simple_nn_forward(x3, w1, b1, w2, b2, rows_per_tile=16)
    jax.block_until_ready(out3)
    ref3 = _ref_forward(x3, w1, b1, w2, b2)
    assert out3.shape == (B3, OUT_DIM)
    assert jnp.allclose(out3, ref3, atol=1e-5, rtol=1e-5)

    print("KERNEL_OK")
</pallas_src>

<mosaic_0001>
module attributes {stable_mosaic.version = 11 : i64} {
  func.func @mlp_kernel(%arg0: i32, %arg1: memref<8x384xf32, #tpu.memory_space<vmem>>, %arg2: memref<384x640xf32, #tpu.memory_space<vmem>>, %arg3: memref<1x640xf32, #tpu.memory_space<vmem>>, %arg4: memref<640x128xf32, #tpu.memory_space<vmem>>, %arg5: memref<1x128xf32, #tpu.memory_space<vmem>>, %arg6: memref<8x128xf32, #tpu.memory_space<vmem>>) attributes {dimension_semantics = [#tpu.dimension_semantics<parallel>], iteration_bounds = array<i64: 1>, scalar_prefetch = 0 : i64, scratch_operands = 0 : i64, tpu.core_type = #tpu.core_type<tc>, window_params = [{transform_indices = @transform_0, window_bounds = array<i64: 8, 384>}, {pipeline_mode = #tpu.pipeline_mode<synchronous>, transform_indices = @transform_1, window_bounds = array<i64: 384, 640>}, {pipeline_mode = #tpu.pipeline_mode<synchronous>, transform_indices = @transform_2, window_bounds = array<i64: 1, 640>}, {pipeline_mode = #tpu.pipeline_mode<synchronous>, transform_indices = @transform_3, window_bounds = array<i64: 640, 128>}, {pipeline_mode = #tpu.pipeline_mode<synchronous>, transform_indices = @transform_4, window_bounds = array<i64: 1, 128>}, {transform_indices = @transform_5, window_bounds = array<i64: 8, 128>}]} {
    %c0 = arith.constant 0 : index
    %c0_0 = arith.constant 0 : index
    %0 = vector.load %arg1[%c0, %c0_0] : memref<8x384xf32, #tpu.memory_space<vmem>>, vector<8x384xf32>
    %c0_1 = arith.constant 0 : index
    %c0_2 = arith.constant 0 : index
    %1 = vector.load %arg2[%c0_1, %c0_2] : memref<384x640xf32, #tpu.memory_space<vmem>>, vector<384x640xf32>
    %cst = arith.constant dense<0.000000e+00> : vector<8x640xf32>
    %2 = tpu.matmul %0, %1, %cst {dimension_numbers = #tpu.dot_dimension_numbers<[1], [0], [0], [1], [0, 0, 1, 1], [], []>} : vector<8x384xf32>, vector<384x640xf32>, vector<8x640xf32> -> vector<8x640xf32>
    %c0_3 = arith.constant 0 : index
    %c0_4 = arith.constant 0 : index
    %3 = vector.load %arg3[%c0_3, %c0_4] : memref<1x640xf32, #tpu.memory_space<vmem>>, vector<1x640xf32>
    %4 = vector.broadcast %3 : vector<1x640xf32> to vector<8x640xf32>
    %5 = arith.addf %2, %4 : vector<8x640xf32>
    %cst_5 = arith.constant 0.000000e+00 : f32
    %6 = vector.broadcast %cst_5 : f32 to vector<8x640xf32>
    %7 = arith.maximumf %5, %6 : vector<8x640xf32>
    %c0_6 = arith.constant 0 : index
    %c0_7 = arith.constant 0 : index
    %8 = vector.load %arg4[%c0_6, %c0_7] : memref<640x128xf32, #tpu.memory_space<vmem>>, vector<640x128xf32>
    %cst_8 = arith.constant dense<0.000000e+00> : vector<8x128xf32>
    %9 = tpu.matmul %7, %8, %cst_8 {dimension_numbers = #tpu.dot_dimension_numbers<[1], [0], [0], [1], [0, 0, 1, 1], [], []>} : vector<8x640xf32>, vector<640x128xf32>, vector<8x128xf32> -> vector<8x128xf32>
    %c0_9 = arith.constant 0 : index
    %c0_10 = arith.constant 0 : index
    %10 = vector.load %arg5[%c0_9, %c0_10] : memref<1x128xf32, #tpu.memory_space<vmem>>, vector<1x128xf32>
    %11 = vector.broadcast %10 : vector<1x128xf32> to vector<8x128xf32>
    %12 = arith.addf %9, %11 : vector<8x128xf32>
    %c0_11 = arith.constant 0 : index
    %c0_12 = arith.constant 0 : index
    %13 = vector.load %arg6[%c0_11, %c0_12] : memref<8x128xf32, #tpu.memory_space<vmem>>, vector<8x128xf32>
    tpu.vector_store %arg6[%c0_11, %c0_12], %12 {strides = array<i32>} : memref<8x128xf32, #tpu.memory_space<vmem>>, vector<8x128xf32>,
    return
  }
  func.func @transform_0(%arg0: i32) -> (i32, i32) {
    %c0_i32 = arith.constant 0 : i32
    %c0_i32_0 = arith.constant 0 : i32
    return %arg0, %c0_i32 : i32, i32
  }
  func.func @transform_1(%arg0: i32) -> (i32, i32) {
    %c0_i32 = arith.constant 0 : i32
    %c0_i32_0 = arith.constant 0 : i32
    %c0_i32_1 = arith.constant 0 : i32
    return %c0_i32, %c0_i32_0 : i32, i32
  }
  func.func @transform_2(%arg0: i32) -> (i32, i32) {
    %c0_i32 = arith.constant 0 : i32
    %c0_i32_0 = arith.constant 0 : i32
    %c0_i32_1 = arith.constant 0 : i32
    return %c0_i32, %c0_i32_0 : i32, i32
  }
  func.func @transform_3(%arg0: i32) -> (i32, i32) {
    %c0_i32 = arith.constant 0 : i32
    %c0_i32_0 = arith.constant 0 : i32
    %c0_i32_1 = arith.constant 0 : i32
    return %c0_i32, %c0_i32_0 : i32, i32
  }
  func.func @transform_4(%arg0: i32) -> (i32, i32) {
    %c0_i32 = arith.constant 0 : i32
    %c0_i32_0 = arith.constant 0 : i32
    %c0_i32_1 = arith.constant 0 : i32
    return %c0_i32, %c0_i32_0 : i32, i32
  }
  func.func @transform_5(%arg0: i32) -> (i32, i32) {
    %c0_i32 = arith.constant 0 : i32
    %c0_i32_0 = arith.constant 0 : i32
    return %arg0, %c0_i32 : i32, i32
  }
}

</mosaic_0001>

<llo_original>
// kernel: tpu_custom_call.1
$region0: #{tpu_custom_call.1}
  #allocation0 [shape = 'u32[]', space=smem, size = 0x4, offset = 0x4, fixed_abs, tag = 'smem constant byte address 0x4 - core index']
  #allocation1 [shape = 'u32[144,128]{1,0:T(1,128)}', space=vmem, size = 0x12000, scoped, tag = 'internal scratch']
  %s0 = inlined_call_operand.hbm [shape: f32[8,384], index: 0, kind: input, shape index: {}]
  %s1 = inlined_call_operand.hbm [shape: f32[384,640], index: 1, kind: input, shape index: {}]
  %s2 = inlined_call_operand.vmem [shape: f32[1,640], index: 2, kind: input, shape index: {}]
  %s3 = inlined_call_operand.hbm [shape: f32[640,128], index: 3, kind: input, shape index: {}]
  %s4 = inlined_call_operand.vmem [shape: f32[1,128], index: 4, kind: input, shape index: {}]
  %s5 = inlined_call_operand.hbm [shape: f32[8,128], index: 5, kind: output, shape index: {}]
  %s6 = sld [smem:[#allocation0]]
  $region42: #{tpu_custom_call.1} parent=0
    _
  %s8 = ssub.s32 1, %s6
  %s9 = scalar_select 0, %s8, %s6
  $region1: #{tpu_custom_call.1} parent=0
    #allocation2 [shape = 'u8[12288]{0}', space=vmem, size = 0x3000, scoped, tag = 'input window, operand 0, single buffered']
    #allocation3 [shape = 's32[1]{0}', space=sflag, size = 0x4, scoped, tag = 'scoped memory for tpu_custom_call.1']
    #allocation4 [shape = 's32[1]{0}', space=sflag, size = 0x4, scoped, tag = 'scoped memory for tpu_custom_call.1']
    #allocation5 [shape = 'u8[983040]{0}', space=vmem, size = 0xf0000, scoped, tag = 'input window, operand 1, single buffered']
    #allocation6 [shape = 's32[1]{0}', space=sflag, size = 0x4, scoped, tag = 'scoped memory for tpu_custom_call.1']
    #allocation7 [shape = 'u8[327680]{0}', space=vmem, size = 0x50000, scoped, tag = 'input window, operand 3, single buffered']
    #allocation8 [shape = 'u8[4096]{0}', space=vmem, size = 0x1000, scoped, tag = 'output window, operand 0, single buffered']
    %10 = vsyncpa [#allocation3], 0
    %11 = vsyncpa [#allocation6], 0
    %12 = vsyncpa [#allocation4], 0
    // Predicated region
    $region2: #{tpu_custom_call.1} parent=1 // pred_check
      _
    $region3: #{tpu_custom_call.1} parent=1 // pred_check_branch
      %14 = sbr.rel (0) target = $region5
    $region4: #{tpu_custom_call.1} parent=1 // pred_region
      %s16 = ssub.s32 384, 384
      %17 = vsyncadd [#allocation3], %s16
      %s19 = sshll.u32 [#allocation2], 4
      %s20 = int_to_ptr.vmem [resolvable:$true] %s19
      %22 = dma.hbm_to_vmem [thread:$0]  %s0, 384, %s20, [#allocation3]
    $region5: #{tpu_custom_call.1} parent=1 // pred_fallthru
      _
    // Predicated region
    $region6: #{tpu_custom_call.1} parent=1 // pred_check
      _
    $region7: #{tpu_custom_call.1} parent=1 // pred_check_branch
      %24 = sbr.rel (0) target = $region9
    $region8: #{tpu_custom_call.1} parent=1 // pred_region
      %s26 = ssub.s32 30720, 30720
      %27 = vsyncadd [#allocation6], %s26
      %s28 = sshll.u32 [#allocation5], 4
      %s29 = int_to_ptr.vmem [resolvable:$true] %s28
      %34 = dma.hbm_to_vmem [thread:$0]  %s1, 30720, %s29, [#allocation6], 640, 640, 40
    $region9: #{tpu_custom_call.1} parent=1 // pred_fallthru
      _
    // Predicated region
    $region10: #{tpu_custom_call.1} parent=1 // pred_check
      _
    $region11: #{tpu_custom_call.1} parent=1 // pred_check_branch
      %36 = sbr.rel (0) target = $region13
    $region12: #{tpu_custom_call.1} parent=1 // pred_region
      _
    $region13: #{tpu_custom_call.1} parent=1 // pred_fallthru
      _
    // Predicated region
    $region14: #{tpu_custom_call.1} parent=1 // pred_check
      _
    $region15: #{tpu_custom_call.1} parent=1 // pred_check_branch
      %38 = sbr.rel (0) target = $region17
    $region16: #{tpu_custom_call.1} parent=1 // pred_region
      %s40 = ssub.s32 10240, 10240
      %41 = vsyncadd [#allocation6], %s40
      %s42 = sshll.u32 [#allocation7], 4
      %s43 = int_to_ptr.vmem [resolvable:$true] %s42
      %48 = dma.hbm_to_vmem [thread:$0]  %s3, 10240, %s43, [#allocation6], 128, 128, 8
    $region17: #{tpu_custom_call.1} parent=1 // pred_fallthru
      _
    // Predicated region
    $region18: #{tpu_custom_call.1} parent=1 // pred_check
      _
    $region19: #{tpu_custom_call.1} parent=1 // pred_check_branch
      %50 = sbr.rel (0) target = $region21
    $region20: #{tpu_custom_call.1} parent=1 // pred_region
      _
    $region21: #{tpu_custom_call.1} parent=1 // pred_fallthru
      _
    // Predicated region
    $region22: #{tpu_custom_call.1} parent=1 // pred_check
      _
    $region23: #{tpu_custom_call.1} parent=1 // pred_check_branch
      %52 = sbr.rel (0) target = $region25
    $region24: #{tpu_custom_call.1} parent=1 // pred_region
      %53 = dma.done [#allocation3], 384
    $region25: #{tpu_custom_call.1} parent=1 // pred_fallthru
      _
    // Predicated region
    $region26: #{tpu_custom_call.1} parent=1 // pred_check
      _
    $region27: #{tpu_custom_call.1} parent=1 // pred_check_branch
      %55 = sbr.rel (0) target = $region29
    $region28: #{tpu_custom_call.1} parent=1 // pred_region
      %56 = dma.done [#allocation6], 30720
    $region29: #{tpu_custom_call.1} parent=1 // pred_fallthru
      _
    // Predicated region
    $region30: #{tpu_custom_call.1} parent=1 // pred_check
      _
    $region31: #{tpu_custom_call.1} parent=1 // pred_check_branch
      %58 = sbr.rel (0) target = $region33
    $region32: #{tpu_custom_call.1} parent=1 // pred_region
      %59 = dma.done [#allocation6], 10240
    $region33: #{tpu_custom_call.1} parent=1 // pred_fallthru
      _
    %v60 = vld [vmem:[#allocation2] sm:$0xff]
    %v61 = vld [vmem:[#allocation2 + $0x8] sm:$0xff]
    %v62 = vld [vmem:[#allocation2 + $0x10] sm:$0xff]
    %v63 = vld [vmem:[#allocation5] sm:$0xff]
    %v64 = vld [vmem:[#allocation5 + $0x8] sm:$0xff]
    %v65 = vld [vmem:[#allocation5 + $0x10] sm:$0xff]
    %v66 = vld [vmem:[#allocation5 + $0x18] sm:$0xff]
    %v67 = vld [vmem:[#allocation5 + $0x20] sm:$0xff]
    %v68 = vld [vmem:[#allocation5 + $0x28] sm:$0xff]
    %v69 = vld [vmem:[#allocation5 + $0x30] sm:$0xff]
    %v70 = vld [vmem:[#allocation5 + $0x38] sm:$0xff]
    %v71 = vld [vmem:[#allocation5 + $0x40] sm:$0xff]
    %v72 = vld [vmem:[#allocation5 + $0x48] sm:$0xff]
    %v73 = vld [vmem:[#allocation5 + $0x50] sm:$0xff]
    %v74 = vld [vmem:[#allocation5 + $0x58] sm:$0xff]
    %v75 = vld [vmem:[#allocation5 + $0x60] sm:$0xff]
    %v76 = vld [vmem:[#allocation5 + $0x68] sm:$0xff]
    %v77 = vld [vmem:[#allocation5 + $0x70] sm:$0xff]
    %v78 = vld [vmem:[#allocation5 + $0x78] sm:$0xff]
    %v79 = vld [vmem:[#allocation5 + $0x80] sm:$0xff]
    %v80 = vld [vmem:[#allocation5 + $0x88] sm:$0xff]
    %v81 = vld [vmem:[#allocation5 + $0x90] sm:$0xff]
    %v82 = vld [vmem:[#allocation5 + $0x98] sm:$0xff]
    %v83 = vld [vmem:[#allocation5 + $0xa0] sm:$0xff]
    %v84 = vld [vmem:[#allocation5 + $0xa8] sm:$0xff]
    %v85 = vld [vmem:[#allocation5 + $0xb0] sm:$0xff]
    %v86 = vld [vmem:[#allocation5 + $0xb8] sm:$0xff]
    %v87 = vld [vmem:[#allocation5 + $0xc0] sm:$0xff]
    %v88 = vld [vmem:[#allocation5 + $0xc8] sm:$0xff]
    %v89 = vld [vmem:[#allocation5 + $0xd0] sm:$0xff]
    %v90 = vld [vmem:[#allocation5 + $0xd8] sm:$0xff]
    %v91 = vld [vmem:[#allocation5 + $0xe0] sm:$0xff]
    %v92 = vld [vmem:[#allocation5 + $0xe8] sm:$0xff]
    %v93 = vld [vmem:[#allocation5 + $0xf0] sm:$0xff]
    %v94 = vld [vmem:[#allocation5 + $0xf8] sm:$0xff]
    %v95 = vld [vmem:[#allocation5 + $0x100] sm:$0xff]
    %v96 = vld [vmem:[#allocation5 + $0x108] sm:$0xff]
    %v97 = vld [vmem:[#allocation5 + $0x110] sm:$0xff]
    %v98 = vld [vmem:[#allocation5 + $0x118] sm:$0xff]
    %v99 = vld [vmem:[#allocation5 + $0x120] sm:$0xff]
    %v100 = vld [vmem:[#allocation5 + $0x128] sm:$0xff]
    %v101 = vld [vmem:[#allocation5 + $0x130] sm:$0xff]
    %v102 = vld [vmem:[#allocation5 + $0x138] sm:$0xff]
    %v103 = vld [vmem:[#allocation5 + $0x140] sm:$0xff]
    %v104 = vld [vmem:[#allocation5 + $0x148] sm:$0xff]
    %v105 = vld [vmem:[#allocation5 + $0x150] sm:$0xff]
    %v106 = vld [vmem:[#allocation5 + $0x158] sm:$0xff]
    %v107 = vld [vmem:[#allocation5 + $0x160] sm:$0xff]
    %v108 = vld [vmem:[#allocation5 + $0x168] sm:$0xff]
    %v109 = vld [vmem:[#allocation5 + $0x170] sm:$0xff]
    %v110 = vld [vmem:[#allocation5 + $0x178] sm:$0xff]
    %v111 = vld [vmem:[#allocation5 + $0x180] sm:$0xff]
    %v112 = vld [vmem:[#allocation5 + $0x188] sm:$0xff]
    %v113 = vld [vmem:[#allocation5 + $0x190] sm:$0xff]
    %v114 = vld [vmem:[#allocation5 + $0x198] sm:$0xff]
    %v115 = vld [vmem:[#allocation5 + $0x1a0] sm:$0xff]
    %v116 = vld [vmem:[#allocation5 + $0x1a8] sm:$0xff]
    %v117 = vld [vmem:[#allocation5 + $0x1b0] sm:$0xff]
    %v118 = vld [vmem:[#allocation5 + $0x1b8] sm:$0xff]
    %v119 = vld [vmem:[#allocation5 + $0x1c0] sm:$0xff]
    %v120 = vld [vmem:[#allocation5 + $0x1c8] sm:$0xff]
    %v121 = vld [vmem:[#allocation5 + $0x1d0] sm:$0xff]
    %v122 = vld [vmem:[#allocation5 + $0x1d8] sm:$0xff]
    %v123 = vld [vmem:[#allocation5 + $0x1e0] sm:$0xff]
    %v124 = vld [vmem:[#allocation5 + $0x1e8] sm:$0xff]
    %v125 = vld [vmem:[#allocation5 + $0x1f0] sm:$0xff]
    %v126 = vld [vmem:[#allocation5 + $0x1f8] sm:$0xff]
    %v127 = vld [vmem:[#allocation5 + $0x200] sm:$0xff]
    %v128 = vld [vmem:[#allocation5 + $0x208] sm:$0xff]
    %v129 = vld [vmem:[#allocation5 + $0x210] sm:$0xff]
    %v130 = vld [vmem:[#allocation5 + $0x218] sm:$0xff]
    %v131 = vld [vmem:[#allocation5 + $0x220] sm:$0xff]
    %v132 = vld [vmem:[#allocation5 + $0x228] sm:$0xff]
    %v133 = vld [vmem:[#allocation5 + $0x230] sm:$0xff]
    %v134 = vld [vmem:[#allocation5 + $0x238] sm:$0xff]
    %v135 = vld [vmem:[#allocation5 + $0x240] sm:$0xff]
    %v136 = vld [vmem:[#allocation5 + $0x248] sm:$0xff]
    %v137 = vld [vmem:[#allocation5 + $0x250] sm:$0xff]
    %v138 = vld [vmem:[#allocation5 + $0x258] sm:$0xff]
    %v139 = vld [vmem:[#allocation5 + $0x260] sm:$0xff]
    %v140 = vld [vmem:[#allocation5 + $0x268] sm:$0xff]
    %v141 = vld [vmem:[#allocation5 + $0x270] sm:$0xff]
    %v142 = vld [vmem:[#allocation5 + $0x278] sm:$0xff]
    %v143 = vld [vmem:[#allocation5 + $0x280] sm:$0xff]
    %v144 = vld [vmem:[#allocation5 + $0x288] sm:$0xff]
    %v145 = vld [vmem:[#allocation5 + $0x290] sm:$0xff]
    %v146 = vld [vmem:[#allocation5 + $0x298] sm:$0xff]
    %v147 = vld [vmem:[#allocation5 + $0x2a0] sm:$0xff]
    %v148 = vld [vmem:[#allocation5 + $0x2a8] sm:$0xff]
    %v149 = vld [vmem:[#allocation5 + $0x2b0] sm:$0xff]
    %v150 = vld [vmem:[#allocation5 + $0x2b8] sm:$0xff]
    %v151 = vld [vmem:[#allocation5 + $0x2c0] sm:$0xff]
    %v152 = vld [vmem:[#allocation5 + $0x2c8] sm:$0xff]
    %v153 = vld [vmem:[#allocation5 + $0x2d0] sm:$0xff]
    %v154 = vld [vmem:[#allocation5 + $0x2d8] sm:$0xff]
    %v155 = vld [vmem:[#allocation5 + $0x2e0] sm:$0xff]
    %v156 = vld [vmem:[#allocation5 + $0x2e8] sm:$0xff]
    %v157 = vld [vmem:[#allocation5 + $0x2f0] sm:$0xff]
    %v158 = vld [vmem:[#allocation5 + $0x2f8] sm:$0xff]
    %v159 = vld [vmem:[#allocation5 + $0x300] sm:$0xff]
    %v160 = vld [vmem:[#allocation5 + $0x308] sm:$0xff]
    %v161 = vld [vmem:[#allocation5 + $0x310] sm:$0xff]
    %v162 = vld [vmem:[#allocation5 + $0x318] sm:$0xff]
    %v163 = vld [vmem:[#allocation5 + $0x320] sm:$0xff]
    %v164 = vld [vmem:[#allocation5 + $0x328] sm:$0xff]
    %v165 = vld [vmem:[#allocation5 + $0x330] sm:$0xff]
    %v166 = vld [vmem:[#allocation5 + $0x338] sm:$0xff]
    %v167 = vld [vmem:[#allocation5 + $0x340] sm:$0xff]
    %v168 = vld [vmem:[#allocation5 + $0x348] sm:$0xff]
    %v169 = vld [vmem:[#allocation5 + $0x350] sm:$0xff]
    %v170 = vld [vmem:[#allocation5 + $0x358] sm:$0xff]
    %v171 = vld [vmem:[#allocation5 + $0x360] sm:$0xff]
    %v172 = vld [vmem:[#allocation5 + $0x368] sm:$0xff]
    %v173 = vld [vmem:[#allocation5 + $0x370] sm:$0xff]
    %v174 = vld [vmem:[#allocation5 + $0x378] sm:$0xff]
    %v175 = vld [vmem:[#allocation5 + $0x380] sm:$0xff]
    %v176 = vld [vmem:[#allocation5 + $0x388] sm:$0xff]
    %v177 = vld [vmem:[#allocation5 + $0x390] sm:$0xff]
    %v178 = vld [vmem:[#allocation5 + $0x398] sm:$0xff]
    %v179 = vld [vmem:[#allocation5 + $0x3a0] sm:$0xff]
    %v180 = vld [vmem:[#allocation5 + $0x3a8] sm:$0xff]
    %v181 = vld [vmem:[#allocation5 + $0x3b0] sm:$0xff]
    %v182 = vld [vmem:[#allocation5 + $0x3b8] sm:$0xff]
    %v183 = vld [vmem:[#allocation5 + $0x3c0] sm:$0xff]
    %v184 = vld [vmem:[#allocation5 + $0x3c8] sm:$0xff]
    %v185 = vld [vmem:[#allocation5 + $0x3d0] sm:$0xff]
    %v186 = vld [vmem:[#allocation5 + $0x3d8] sm:$0xff]
    %v187 = vld [vmem:[#allocation5 + $0x3e0] sm:$0xff]
    %v188 = vld [vmem:[#allocation5 + $0x3e8] sm:$0xff]
    %v189 = vld [vmem:[#allocation5 + $0x3f0] sm:$0xff]
    %v190 = vld [vmem:[#allocation5 + $0x3f8] sm:$0xff]
    %v191 = vld [vmem:[#allocation5 + $0x400] sm:$0xff]
    %v192 = vld [vmem:[#allocation5 + $0x408] sm:$0xff]
    %v193 = vld [vmem:[#allocation5 + $0x410] sm:$0xff]
    %v194 = vld [vmem:[#allocation5 + $0x418] sm:$0xff]
    %v195 = vld [vmem:[#allocation5 + $0x420] sm:$0xff]
    %v196 = vld [vmem:[#allocation5 + $0x428] sm:$0xff]
    %v197 = vld [vmem:[#allocation5 + $0x430] sm:$0xff]
    %v198 = vld [vmem:[#allocation5 + $0x438] sm:$0xff]
    %v199 = vld [vmem:[#allocation5 + $0x440] sm:$0xff]
    %v200 = vld [vmem:[#allocation5 + $0x448] sm:$0xff]
    %v201 = vld [vmem:[#allocation5 + $0x450] sm:$0xff]
    %v202 = vld [vmem:[#allocation5 + $0x458] sm:$0xff]
    %v203 = vld [vmem:[#allocation5 + $0x460] sm:$0xff]
    %v204 = vld [vmem:[#allocation5 + $0x468] sm:$0xff]
    %v205 = vld [vmem:[#allocation5 + $0x470] sm:$0xff]
    %v206 = vld [vmem:[#allocation5 + $0x478] sm:$0xff]
    %v207 = vld [vmem:[#allocation5 + $0x480] sm:$0xff]
    %v208 = vld [vmem:[#allocation5 + $0x488] sm:$0xff]
    %v209 = vld [vmem:[#allocation5 + $0x490] sm:$0xff]
    %v210 = vld [vmem:[#allocation5 + $0x498] sm:$0xff]
    %v211 = vld [vmem:[#allocation5 + $0x4a0] sm:$0xff]
    %v212 = vld [vmem:[#allocation5 + $0x4a8] sm:$0xff]
    %v213 = vld [vmem:[#allocation5 + $0x4b0] sm:$0xff]
    %v214 = vld [vmem:[#allocation5 + $0x4b8] sm:$0xff]
    %v215 = vld [vmem:[#allocation5 + $0x4c0] sm:$0xff]
    %v216 = vld [vmem:[#allocation5 + $0x4c8] sm:$0xff]
    %v217 = vld [vmem:[#allocation5 + $0x4d0] sm:$0xff]
    %v218 = vld [vmem:[#allocation5 + $0x4d8] sm:$0xff]
    %v219 = vld [vmem:[#allocation5 + $0x4e0] sm:$0xff]
    %v220 = vld [vmem:[#allocation5 + $0x4e8] sm:$0xff]
    %v221 = vld [vmem:[#allocation5 + $0x4f0] sm:$0xff]
    %v222 = vld [vmem:[#allocation5 + $0x4f8] sm:$0xff]
    %v223 = vld [vmem:[#allocation5 + $0x500] sm:$0xff]
    %v224 = vld [vmem:[#allocation5 + $0x508] sm:$0xff]
    %v225 = vld [vmem:[#allocation5 + $0x510] sm:$0xff]
    %v226 = vld [vmem:[#allocation5 + $0x518] sm:$0xff]
    %v227 = vld [vmem:[#allocation5 + $0x520] sm:$0xff]
    %v228 = vld [vmem:[#allocation5 + $0x528] sm:$0xff]
    %v229 = vld [vmem:[#allocation5 + $0x530] sm:$0xff]
    %v230 = vld [vmem:[#allocation5 + $0x538] sm:$0xff]
    %v231 = vld [vmem:[#allocation5 + $0x540] sm:$0xff]
    %v232 = vld [vmem:[#allocation5 + $0x548] sm:$0xff]
    %v233 = vld [vmem:[#allocation5 + $0x550] sm:$0xff]
    %v234 = vld [vmem:[#allocation5 + $0x558] sm:$0xff]
    %v235 = vld [vmem:[#allocation5 + $0x560] sm:$0xff]
    %v236 = vld [vmem:[#allocation5 + $0x568] sm:$0xff]
    %v237 = vld [vmem:[#allocation5 + $0x570] sm:$0xff]
    %v238 = vld [vmem:[#allocation5 + $0x578] sm:$0xff]
    %v239 = vld [vmem:[#allocation5 + $0x580] sm:$0xff]
    %v240 = vld [vmem:[#allocation5 + $0x588] sm:$0xff]
    %v241 = vld [vmem:[#allocation5 + $0x590] sm:$0xff]
    %v242 = vld [vmem:[#allocation5 + $0x598] sm:$0xff]
    %v243 = vld [vmem:[#allocation5 + $0x5a0] sm:$0xff]
    %v244 = vld [vmem:[#allocation5 + $0x5a8] sm:$0xff]
    %v245 = vld [vmem:[#allocation5 + $0x5b0] sm:$0xff]
    %v246 = vld [vmem:[#allocation5 + $0x5b8] sm:$0xff]
    %v247 = vld [vmem:[#allocation5 + $0x5c0] sm:$0xff]
    %v248 = vld [vmem:[#allocation5 + $0x5c8] sm:$0xff]
    %v249 = vld [vmem:[#allocation5 + $0x5d0] sm:$0xff]
    %v250 = vld [vmem:[#allocation5 + $0x5d8] sm:$0xff]
    %v251 = vld [vmem:[#allocation5 + $0x5e0] sm:$0xff]
    %v252 = vld [vmem:[#allocation5 + $0x5e8] sm:$0xff]
    %v253 = vld [vmem:[#allocation5 + $0x5f0] sm:$0xff]
    %v254 = vld [vmem:[#allocation5 + $0x5f8] sm:$0xff]
    %v255 = vld [vmem:[#allocation5 + $0x600] sm:$0xff]
    %v256 = vld [vmem:[#allocation5 + $0x608] sm:$0xff]
    %v257 = vld [vmem:[#allocation5 + $0x610] sm:$0xff]
    %v258 = vld [vmem:[#allocation5 + $0x618] sm:$0xff]
    %v259 = vld [vmem:[#allocation5 + $0x620] sm:$0xff]
    %v260 = vld [vmem:[#allocation5 + $0x628] sm:$0xff]
    %v261 = vld [vmem:[#allocation5 + $0x630] sm:$0xff]
    %v262 = vld [vmem:[#allocation5 + $0x638] sm:$0xff]
    %v263 = vld [vmem:[#allocation5 + $0x640] sm:$0xff]
    %v264 = vld [vmem:[#allocation5 + $0x648] sm:$0xff]
    %v265 = vld [vmem:[#allocation5 + $0x650] sm:$0xff]
    %v266 = vld [vmem:[#allocation5 + $0x658] sm:$0xff]
    %v267 = vld [vmem:[#allocation5 + $0x660] sm:$0xff]
    %v268 = vld [vmem:[#allocation5 + $0x668] sm:$0xff]
    %v269 = vld [vmem:[#allocation5 + $0x670] sm:$0xff]
    %v270 = vld [vmem:[#allocation5 + $0x678] sm:$0xff]
    %v271 = vld [vmem:[#allocation5 + $0x680] sm:$0xff]
    %v272 = vld [vmem:[#allocation5 + $0x688] sm:$0xff]
    %v273 = vld [vmem:[#allocation5 + $0x690] sm:$0xff]
    %v274 = vld [vmem:[#allocation5 + $0x698] sm:$0xff]
    %v275 = vld [vmem:[#allocation5 + $0x6a0] sm:$0xff]
    %v276 = vld [vmem:[#allocation5 + $0x6a8] sm:$0xff]
    %v277 = vld [vmem:[#allocation5 + $0x6b0] sm:$0xff]
    %v278 = vld [vmem:[#allocation5 + $0x6b8] sm:$0xff]
    %v279 = vld [vmem:[#allocation5 + $0x6c0] sm:$0xff]
    %v280 = vld [vmem:[#allocation5 + $0x6c8] sm:$0xff]
    %v281 = vld [vmem:[#allocation5 + $0x6d0] sm:$0xff]
    %v282 = vld [vmem:[#allocation5 + $0x6d8] sm:$0xff]
    %v283 = vld [vmem:[#allocation5 + $0x6e0] sm:$0xff]
    %v284 = vld [vmem:[#allocation5 + $0x6e8] sm:$0xff]
    %v285 = vld [vmem:[#allocation5 + $0x6f0] sm:$0xff]
    %v286 = vld [vmem:[#allocation5 + $0x6f8] sm:$0xff]
    %v287 = vld [vmem:[#allocation5 + $0x700] sm:$0xff]
    %v288 = vld [vmem:[#allocation5 + $0x708] sm:$0xff]
    %v289 = vld [vmem:[#allocation5 + $0x710] sm:$0xff]
    %v290 = vld [vmem:[#allocation5 + $0x718] sm:$0xff]
    %v291 = vld [vmem:[#allocation5 + $0x720] sm:$0xff]
    %v292 = vld [vmem:[#allocation5 + $0x728] sm:$0xff]
    %v293 = vld [vmem:[#allocation5 + $0x730] sm:$0xff]
    %v294 = vld [vmem:[#allocation5 + $0x738] sm:$0xff]
    %v295 = vld [vmem:[#allocation5 + $0x740] sm:$0xff]
    %v296 = vld [vmem:[#allocation5 + $0x748] sm:$0xff]
    %v297 = vld [vmem:[#allocation5 + $0x750] sm:$0xff]
    %v298 = vld [vmem:[#allocation5 + $0x758] sm:$0xff]
    %v299 = vld [vmem:[#allocation5 + $0x760] sm:$0xff]
    %v300 = vld [vmem:[#allocation5 + $0x768] sm:$0xff]
    %v301 = vld [vmem:[#allocation5 + $0x770] sm:$0xff]
    %v302 = vld [vmem:[#allocation5 + $0x778] sm:$0xff]
    %v303 = vld [vmem:[%s2] sm:$0x1f]
    %v305 = vlaneseq
    %v306 = vshrl.u32 %v305, 7
    %v307 = vsub.s32 0, %v306
    %v308 = vrot.slane %v303, %v307
    %v309 = vlaneseq
    %v310 = vshrl.u32 %v309, 7
    %v311 = vsub.s32 1, %v310
    %v312 = vrot.slane %v303, %v311
    %v313 = vlaneseq
    %v314 = vshrl.u32 %v313, 7
    %v315 = vsub.s32 2, %v314
    %v316 = vrot.slane %v303, %v315
    %v317 = vlaneseq
    %v318 = vshrl.u32 %v317, 7
    %v319 = vsub.s32 3, %v318
    %v320 = vrot.slane %v303, %v319
    %v321 = vlaneseq
    %v322 = vshrl.u32 %v321, 7
    %v323 = vsub.s32 4, %v322
    %v324 = vrot.slane %v303, %v323
    %330 = vmatprep.subr.mxu0 %v64
    %331 = vmatpush1.msra.mxu0 %v63
    %332 = vmatprep.subr.mxu0 %v69
    %333 = vmatpush1.msra.mxu0 %v68
    %334 = vmatprep.subr.mxu0 %v74
    %335 = vmatpush1.msra.mxu0 %v73
    %336 = vmatprep.subr.mxu0 %v79
    %337 = vmatpush1.msra.mxu0 %v78
    %338 = vmatprep.subr.mxu0 %v84
    %339 = vmatpush1.msra.mxu0 %v83
    %340 = vmatprep.subr.mxu0 %v89
    %341 = vmatpush1.msra.mxu0 %v88
    %342 = vmatprep.subr.mxu0 %v94
    %343 = vmatpush1.msra.mxu0 %v93
    %344 = vmatprep.subr.mxu0 %v99
    %345 = vmatpush1.msra.mxu0 %v98
    %346 = vmatprep.subr.mxu0 %v104
    %347 = vmatpush1.msra.mxu0 %v103
    %348 = vmatprep.subr.mxu0 %v109
    %349 = vmatpush1.msra.mxu0 %v108
    %350 = vmatprep.subr.mxu0 %v114
    %351 = vmatpush1.msra.mxu0 %v113
    %352 = vmatprep.subr.mxu0 %v119
    %353 = vmatpush1.msra.mxu0 %v118
    %354 = vmatprep.subr.mxu0 %v124
    %355 = vmatpush1.msra.mxu0 %v123
    %356 = vmatprep.subr.mxu0 %v129
    %357 = vmatpush1.msra.mxu0 %v128
    %358 = vmatprep.subr.mxu0 %v134
    %359 = vmatpush1.msra.mxu0 %v133
    %360 = vmatprep.subr.mxu0 %v139
    %361 = vmatpush1.msra.mxu0 %v138
    %362 = vmatprep.subr.mxu0 %v144
    %363 = vmatpush1.msra.mxu0 %v143
    %364 = vmatprep.subr.mxu0 %v149
    %365 = vmatpush1.msra.mxu0 %v148
    %366 = vmatprep.subr.mxu0 %v154
    %367 = vmatpush1.msra.mxu0 %v153
    %368 = vmatprep.subr.mxu0 %v159
    %369 = vmatpush1.msra.mxu0 %v158
    %370 = vmatprep.subr.mxu0 %v164
    %371 = vmatpush1.msra.mxu0 %v163
    %372 = vmatprep.subr.mxu0 %v169
    %373 = vmatpush1.msra.mxu0 %v168
    %374 = vmatprep.subr.mxu0 %v174
    %375 = vmatpush1.msra.mxu0 %v173
    %376 = vmatprep.subr.mxu0 %v179
    %377 = vmatpush1.msra.mxu0 %v178
    %378 = vmatprep.subr.mxu0 %v184
    %379 = vmatpush1.msra.mxu0 %v183
    %380 = vmatprep.subr.mxu0 %v189
    %381 = vmatpush1.msra.mxu0 %v188
    %382 = vmatprep.subr.mxu0 %v194
    %383 = vmatpush1.msra.mxu0 %v193
    %384 = vmatprep.subr.mxu0 %v199
    %385 = vmatpush1.msra.mxu0 %v198
    %386 = vmatprep.subr.mxu0 %v204
    %387 = vmatpush1.msra.mxu0 %v203
    %388 = vmatprep.subr.mxu0 %v209
    %389 = vmatpush1.msra.mxu0 %v208
    %390 = vmatprep.subr.mxu0 %v214
    %391 = vmatpush1.msra.mxu0 %v213
    %392 = vmatprep.subr.mxu0 %v219
    %393 = vmatpush1.msra.mxu0 %v218
    %394 = vmatprep.mubr.f32.mxu0 %v61
    %395 = vmatmul.mubr.f32.gmra.mrb[0].mxu0 %v60
    %v396 = vpop.f32.mrb[0].mxu0
    %v397 = vadd.f32 %v308, %v396
    %v398 = vpop.f32.mrb[0].mxu0
    %v399 = vadd.f32 %v312, %v398
    %400 = vdwg.mxu0
    %401 = vmatprep.subr.mxu0 %v224
    %402 = vmatpush1.msra.mxu0 %v223
    %403 = vmatprep.subr.mxu0 %v229
    %404 = vmatpush1.msra.mxu0 %v228
    %405 = vmatprep.subr.mxu0 %v234
    %406 = vmatpush1.msra.mxu0 %v233
    %407 = vmatprep.subr.mxu0 %v239
    %408 = vmatpush1.msra.mxu0 %v238
    %409 = vmatprep.subr.mxu0 %v244
    %410 = vmatpush1.msra.mxu0 %v243
    %411 = vmatprep.subr.mxu0 %v249
    %412 = vmatpush1.msra.mxu0 %v248
    %413 = vmatprep.subr.mxu0 %v254
    %414 = vmatpush1.msra.mxu0 %v253
    %415 = vmatprep.subr.mxu0 %v259
    %416 = vmatpush1.msra.mxu0 %v258
    %417 = vmatprep.subr.mxu0 %v264
    %418 = vmatpush1.msra.mxu0 %v263
    %419 = vmatprep.subr.mxu0 %v269
    %420 = vmatpush1.msra.mxu0 %v268
    %421 = vmatprep.subr.mxu0 %v274
    %422 = vmatpush1.msra.mxu0 %v273
    %423 = vmatprep.subr.mxu0 %v279
    %424 = vmatpush1.msra.mxu0 %v278
    %425 = vmatprep.subr.mxu0 %v284
    %426 = vmatpush1.msra.mxu0 %v283
    %427 = vmatprep.subr.mxu0 %v289
    %428 = vmatpush1.msra.mxu0 %v288
    %429 = vmatprep.subr.mxu0 %v294
    %430 = vmatpush1.msra.mxu0 %v293
    %431 = vmatprep.subr.mxu0 %v299
    %432 = vmatpush1.msra.mxu0 %v298
    %433 = vmatprep.subr.mxu0 0.0
    %434 = vmatpush1.msra.mxu0 0.0
    %435 = vmatprep.subr.mxu0 0.0
    %436 = vmatpush1.msra.mxu0 0.0
    %437 = vmatprep.subr.mxu0 0.0
    %438 = vmatpush1.msra.mxu0 0.0
    %439 = vmatprep.subr.mxu0 0.0
    %440 = vmatpush1.msra.mxu0 0.0
    %441 = vmatprep.subr.mxu0 0.0
    %442 = vmatpush1.msra.mxu0 0.0
    %443 = vmatprep.subr.mxu0 0.0
    %444 = vmatpush1.msra.mxu0 0.0
    %445 = vmatprep.subr.mxu0 0.0
    %446 = vmatpush1.msra.mxu0 0.0
    %447 = vmatprep.subr.mxu0 0.0
    %448 = vmatpush1.msra.mxu0 0.0
    %449 = vmatprep.subr.mxu0 0.0
    %450 = vmatpush1.msra.mxu0 0.0
    %451 = vmatprep.subr.mxu0 0.0
    %452 = vmatpush1.msra.mxu0 0.0
    %453 = vmatprep.subr.mxu0 0.0
    %454 = vmatpush1.msra.mxu0 0.0
    %455 = vmatprep.subr.mxu0 0.0
    %456 = vmatpush1.msra.mxu0 0.0
    %457 = vmatprep.subr.mxu0 0.0
    %458 = vmatpush1.msra.mxu0 0.0
    %459 = vmatprep.subr.mxu0 0.0
    %460 = vmatpush1.msra.mxu0 0.0
    %461 = vmatprep.subr.mxu0 0.0
    %462 = vmatpush1.msra.mxu0 0.0
    %463 = vmatprep.subr.mxu0 0.0
    %464 = vmatpush1.msra.mxu0 0.0
    %465 = vmatprep.mubr.f32.mxu0 0.0
    %466 = vmatmul.mubr.f32.gmra.mrb[0].mxu0 %v62
    %v467 = vpop.f32.mrb[0].mxu0
    %v468 = vadd.f32 %v397, %v467
    %v469 = vpop.f32.mrb[0].mxu0
    %v470 = vadd.f32 %v399, %v469
    %471 = vdwg.mxu0
    %472 = vmatprep.subr.mxu0 %v66
    %473 = vmatpush1.msra.mxu0 %v65
    %474 = vmatprep.subr.mxu0 %v71
    %475 = vmatpush1.msra.mxu0 %v70
    %476 = vmatprep.subr.mxu0 %v76
    %477 = vmatpush1.msra.mxu0 %v75
    %478 = vmatprep.subr.mxu0 %v81
    %479 = vmatpush1.msra.mxu0 %v80
    %480 = vmatprep.subr.mxu0 %v86
    %481 = vmatpush1.msra.mxu0 %v85
    %482 = vmatprep.subr.mxu0 %v91
    %483 = vmatpush1.msra.mxu0 %v90
    %484 = vmatprep.subr.mxu0 %v96
    %485 = vmatpush1.msra.mxu0 %v95
    %486 = vmatprep.subr.mxu0 %v101
    %487 = vmatpush1.msra.mxu0 %v100
    %488 = vmatprep.subr.mxu0 %v106
    %489 = vmatpush1.msra.mxu0 %v105
    %490 = vmatprep.subr.mxu0 %v111
    %491 = vmatpush1.msra.mxu0 %v110
    %492 = vmatprep.subr.mxu0 %v116
    %493 = vmatpush1.msra.mxu0 %v115
    %494 = vmatprep.subr.mxu0 %v121
    %495 = vmatpush1.msra.mxu0 %v120
    %496 = vmatprep.subr.mxu0 %v126
    %497 = vmatpush1.msra.mxu0 %v125
    %498 = vmatprep.subr.mxu0 %v131
    %499 = vmatpush1.msra.mxu0 %v130
    %500 = vmatprep.subr.mxu0 %v136
    %501 = vmatpush1.msra.mxu0 %v135
    %502 = vmatprep.subr.mxu0 %v141
    %503 = vmatpush1.msra.mxu0 %v140
    %504 = vmatprep.subr.mxu0 %v146
    %505 = vmatpush1.msra.mxu0 %v145
    %506 = vmatprep.subr.mxu0 %v151
    %507 = vmatpush1.msra.mxu0 %v150
    %508 = vmatprep.subr.mxu0 %v156
    %509 = vmatpush1.msra.mxu0 %v155
    %510 = vmatprep.subr.mxu0 %v161
    %511 = vmatpush1.msra.mxu0 %v160
    %512 = vmatprep.subr.mxu0 %v166
    %513 = vmatpush1.msra.mxu0 %v165
    %514 = vmatprep.subr.mxu0 %v171
    %515 = vmatpush1.msra.mxu0 %v170
    %516 = vmatprep.subr.mxu0 %v176
    %517 = vmatpush1.msra.mxu0 %v175
    %518 = vmatprep.subr.mxu0 %v181
    %519 = vmatpush1.msra.mxu0 %v180
    %520 = vmatprep.subr.mxu0 %v186
    %521 = vmatpush1.msra.mxu0 %v185
    %522 = vmatprep.subr.mxu0 %v191
    %523 = vmatpush1.msra.mxu0 %v190
    %524 = vmatprep.subr.mxu0 %v196
    %525 = vmatpush1.msra.mxu0 %v195
    %526 = vmatprep.subr.mxu0 %v201
    %527 = vmatpush1.msra.mxu0 %v200
    %528 = vmatprep.subr.mxu0 %v206
    %529 = vmatpush1.msra.mxu0 %v205
    %530 = vmatprep.subr.mxu0 %v211
    %531 = vmatpush1.msra.mxu0 %v210
    %532 = vmatprep.subr.mxu0 %v216
    %533 = vmatpush1.msra.mxu0 %v215
    %534 = vmatprep.subr.mxu0 %v221
    %535 = vmatpush1.msra.mxu0 %v220
    %536 = vmatprep.mubr.f32.mxu0 %v61
    %537 = vmatmul.mubr.f32.gmra.mrb[0].mxu0 %v60
    %v538 = vpop.f32.mrb[0].mxu0
    %v539 = vadd.f32 %v316, %v538
    %v540 = vpop.f32.mrb[0].mxu0
    %v541 = vadd.f32 %v320, %v540
    %542 = vdwg.mxu0
    %543 = vmatprep.subr.mxu0 %v226
    %544 = vmatpush1.msra.mxu0 %v225
    %545 = vmatprep.subr.mxu0 %v231
    %546 = vmatpush1.msra.mxu0 %v230
    %547 = vmatprep.subr.mxu0 %v236
    %548 = vmatpush1.msra.mxu0 %v235
    %549 = vmatprep.subr.mxu0 %v241
    %550 = vmatpush1.msra.mxu0 %v240
    %551 = vmatprep.subr.mxu0 %v246
    %552 = vmatpush1.msra.mxu0 %v245
    %553 = vmatprep.subr.mxu0 %v251
    %554 = vmatpush1.msra.mxu0 %v250
    %555 = vmatprep.subr.mxu0 %v256
    %556 = vmatpush1.msra.mxu0 %v255
    %557 = vmatprep.subr.mxu0 %v261
    %558 = vmatpush1.msra.mxu0 %v260
    %559 = vmatprep.subr.mxu0 %v266
    %560 = vmatpush1.msra.mxu0 %v265
    %561 = vmatprep.subr.mxu0 %v271
    %562 = vmatpush1.msra.mxu0 %v270
    %563 = vmatprep.subr.mxu0 %v276
    %564 = vmatpush1.msra.mxu0 %v275
    %565 = vmatprep.subr.mxu0 %v281
    %566 = vmatpush1.msra.mxu0 %v280
    %567 = vmatprep.subr.mxu0 %v286
    %568 = vmatpush1.msra.mxu0 %v285
    %569 = vmatprep.subr.mxu0 %v291
    %570 = vmatpush1.msra.mxu0 %v290
    %571 = vmatprep.subr.mxu0 %v296
    %572 = vmatpush1.msra.mxu0 %v295
    %573 = vmatprep.subr.mxu0 %v301
    %574 = vmatpush1.msra.mxu0 %v300
    %575 = vmatprep.subr.mxu0 0.0
    %576 = vmatpush1.msra.mxu0 0.0
    %577 = vmatprep.subr.mxu0 0.0
    %578 = vmatpush1.msra.mxu0 0.0
    %579 = vmatprep.subr.mxu0 0.0
    %580 = vmatpush1.msra.mxu0 0.0
    %581 = vmatprep.subr.mxu0 0.0
    %582 = vmatpush1.msra.mxu0 0.0
    %583 = vmatprep.subr.mxu0 0.0
    %584 = vmatpush1.msra.mxu0 0.0
    %585 = vmatprep.subr.mxu0 0.0
    %586 = vmatpush1.msra.mxu0 0.0
    %587 = vmatprep.subr.mxu0 0.0
    %588 = vmatpush1.msra.mxu0 0.0
    %589 = vmatprep.subr.mxu0 0.0
    %590 = vmatpush1.msra.mxu0 0.0
    %591 = vmatprep.subr.mxu0 0.0
    %592 = vmatpush1.msra.mxu0 0.0
    %593 = vmatprep.subr.mxu0 0.0
    %594 = vmatpush1.msra.mxu0 0.0
    %595 = vmatprep.subr.mxu0 0.0
    %596 = vmatpush1.msra.mxu0 0.0
    %597 = vmatprep.subr.mxu0 0.0
    %598 = vmatpush1.msra.mxu0 0.0
    %599 = vmatprep.subr.mxu0 0.0
    %600 = vmatpush1.msra.mxu0 0.0
    %601 = vmatprep.subr.mxu0 0.0
    %602 = vmatpush1.msra.mxu0 0.0
    %603 = vmatprep.subr.mxu0 0.0
    %604 = vmatpush1.msra.mxu0 0.0
    %605 = vmatprep.subr.mxu0 0.0
    %606 = vmatpush1.msra.mxu0 0.0
    %607 = vmatprep.mubr.f32.mxu0 0.0
    %608 = vmatmul.mubr.f32.gmra.mrb[0].mxu0 %v62
    %v609 = vpop.f32.mrb[0].mxu0
    %v610 = vadd.f32 %v539, %v609
    %v611 = vpop.f32.mrb[0].mxu0
    %v612 = vadd.f32 %v541, %v611
    %613 = vdwg.mxu0
    %614 = vmatprep.subr.mxu0 0.0
    %615 = vmatpush1.msra.mxu0 %v67
    %616 = vmatprep.subr.mxu0 0.0
    %617 = vmatpush1.msra.mxu0 %v72
    %618 = vmatprep.subr.mxu0 0.0
    %619 = vmatpush1.msra.mxu0 %v77
    %620 = vmatprep.subr.mxu0 0.0
    %621 = vmatpush1.msra.mxu0 %v82
    %622 = vmatprep.subr.mxu0 0.0
    %623 = vmatpush1.msra.mxu0 %v87
    %624 = vmatprep.subr.mxu0 0.0
    %625 = vmatpush1.msra.mxu0 %v92
    %626 = vmatprep.subr.mxu0 0.0
    %627 = vmatpush1.msra.mxu0 %v97
    %628 = vmatprep.subr.mxu0 0.0
    %629 = vmatpush1.msra.mxu0 %v102
    %630 = vmatprep.subr.mxu0 0.0
    %631 = vmatpush1.msra.mxu0 %v107
    %632 = vmatprep.subr.mxu0 0.0
    %633 = vmatpush1.msra.mxu0 %v112
    %634 = vmatprep.subr.mxu0 0.0
    %635 = vmatpush1.msra.mxu0 %v117
    %636 = vmatprep.subr.mxu0 0.0
    %637 = vmatpush1.msra.mxu0 %v122
    %638 = vmatprep.subr.mxu0 0.0
    %639 = vmatpush1.msra.mxu0 %v127
    %640 = vmatprep.subr.mxu0 0.0
    %641 = vmatpush1.msra.mxu0 %v132
    %642 = vmatprep.subr.mxu0 0.0
    %643 = vmatpush1.msra.mxu0 %v137
    %644 = vmatprep.subr.mxu0 0.0
    %645 = vmatpush1.msra.mxu0 %v142
    %646 = vmatprep.subr.mxu0 0.0
    %647 = vmatpush1.msra.mxu0 %v147
    %648 = vmatprep.subr.mxu0 0.0
    %649 = vmatpush1.msra.mxu0 %v152
    %650 = vmatprep.subr.mxu0 0.0
    %651 = vmatpush1.msra.mxu0 %v157
    %652 = vmatprep.subr.mxu0 0.0
    %653 = vmatpush1.msra.mxu0 %v162
    %654 = vmatprep.subr.mxu0 0.0
    %655 = vmatpush1.msra.mxu0 %v167
    %656 = vmatprep.subr.mxu0 0.0
    %657 = vmatpush1.msra.mxu0 %v172
    %658 = vmatprep.subr.mxu0 0.0
    %659 = vmatpush1.msra.mxu0 %v177
    %660 = vmatprep.subr.mxu0 0.0
    %661 = vmatpush1.msra.mxu0 %v182
    %662 = vmatprep.subr.mxu0 0.0
    %663 = vmatpush1.msra.mxu0 %v187
    %664 = vmatprep.subr.mxu0 0.0
    %665 = vmatpush1.msra.mxu0 %v192
    %666 = vmatprep.subr.mxu0 0.0
    %667 = vmatpush1.msra.mxu0 %v197
    %668 = vmatprep.subr.mxu0 0.0
    %669 = vmatpush1.msra.mxu0 %v202
    %670 = vmatprep.subr.mxu0 0.0
    %671 = vmatpush1.msra.mxu0 %v207
    %672 = vmatprep.subr.mxu0 0.0
    %673 = vmatpush1.msra.mxu0 %v212
    %674 = vmatprep.subr.mxu0 0.0
    %675 = vmatpush1.msra.mxu0 %v217
    %676 = vmatprep.subr.mxu0 0.0
    %677 = vmatpush1.msra.mxu0 %v222
    %678 = vmatprep.mubr.f32.mxu0 %v61
    %679 = vmatmul.mubr.f32.gmra.mrb[0].mxu0 %v60
    %v680 = vpop.f32.mrb[0].mxu0
    %v681 = vadd.f32 %v324, %v680
    %v682 = vpop.f32.mrb[0].mxu0
    %683 = vdwg.mxu0
    %684 = vmatprep.subr.mxu0 0.0
    %685 = vmatpush1.msra.mxu0 %v227
    %686 = vmatprep.subr.mxu0 0.0
    %687 = vmatpush1.msra.mxu0 %v232
    %688 = vmatprep.subr.mxu0 0.0
    %689 = vmatpush1.msra.mxu0 %v237
    %690 = vmatprep.subr.mxu0 0.0
    %691 = vmatpush1.msra.mxu0 %v242
    %692 = vmatprep.subr.mxu0 0.0
    %693 = vmatpush1.msra.mxu0 %v247
    %694 = vmatprep.subr.mxu0 0.0
    %695 = vmatpush1.msra.mxu0 %v252
    %696 = vmatprep.subr.mxu0 0.0
    %697 = vmatpush1.msra.mxu0 %v257
    %698 = vmatprep.subr.mxu0 0.0
    %699 = vmatpush1.msra.mxu0 %v262
    %700 = vmatprep.subr.mxu0 0.0
    %701 = vmatpush1.msra.mxu0 %v267
    %702 = vmatprep.subr.mxu0 0.0
    %703 = vmatpush1.msra.mxu0 %v272
    %704 = vmatprep.subr.mxu0 0.0
    %705 = vmatpush1.msra.mxu0 %v277
    %706 = vmatprep.subr.mxu0 0.0
    %707 = vmatpush1.msra.mxu0 %v282
    %708 = vmatprep.subr.mxu0 0.0
    %709 = vmatpush1.msra.mxu0 %v287
    %710 = vmatprep.subr.mxu0 0.0
    %711 = vmatpush1.msra.mxu0 %v292
    %712 = vmatprep.subr.mxu0 0.0
    %713 = vmatpush1.msra.mxu0 %v297
    %714 = vmatprep.subr.mxu0 0.0
    %715 = vmatpush1.msra.mxu0 %v302
    %716 = vmatprep.subr.mxu0 0.0
    %717 = vmatpush1.msra.mxu0 0.0
    %718 = vmatprep.subr.mxu0 0.0
    %719 = vmatpush1.msra.mxu0 0.0
    %720 = vmatprep.subr.mxu0 0.0
    %721 = vmatpush1.msra.mxu0 0.0
    %722 = vmatprep.subr.mxu0 0.0
    %723 = vmatpush1.msra.mxu0 0.0
    %724 = vmatprep.subr.mxu0 0.0
    %725 = vmatpush1.msra.mxu0 0.0
    %726 = vmatprep.subr.mxu0 0.0
    %727 = vmatpush1.msra.mxu0 0.0
    %728 = vmatprep.subr.mxu0 0.0
    %729 = vmatpush1.msra.mxu0 0.0
    %730 = vmatprep.subr.mxu0 0.0
    %731 = vmatpush1.msra.mxu0 0.0
    %732 = vmatprep.subr.mxu0 0.0
    %733 = vmatpush1.msra.mxu0 0.0
    %734 = vmatprep.subr.mxu0 0.0
    %735 = vmatpush1.msra.mxu0 0.0
    %736 = vmatprep.subr.mxu0 0.0
    %737 = vmatpush1.msra.mxu0 0.0
    %738 = vmatprep.subr.mxu0 0.0
    %739 = vmatpush1.msra.mxu0 0.0
    %740 = vmatprep.subr.mxu0 0.0
    %741 = vmatpush1.msra.mxu0 0.0
    %742 = vmatprep.subr.mxu0 0.0
    %743 = vmatpush1.msra.mxu0 0.0
    %744 = vmatprep.subr.mxu0 0.0
    %745 = vmatpush1.msra.mxu0 0.0
    %746 = vmatprep.subr.mxu0 0.0
    %747 = vmatpush1.msra.mxu0 0.0
    %748 = vmatprep.mubr.f32.mxu0 0.0
    %749 = vmatmul.mubr.f32.gmra.mrb[0].mxu0 %v62
    %v750 = vpop.f32.mrb[0].mxu0
    %v751 = vadd.f32 %v681, %v750
    %v752 = vpop.f32.mrb[0].mxu0
    %753 = vdwg.mxu0
    %v754 = vmax.f32 %v468, 0.0
    %v755 = vmax.f32 %v470, 0.0
    %v756 = vmax.f32 %v610, 0.0
    %v757 = vmax.f32 %v612, 0.0
    %v758 = vmax.f32 %v751, 0.0
    %v759 = vld [vmem:[#allocation7] sm:$0xff]
    %v760 = vld [vmem:[#allocation7 + $0x8] sm:$0xff]
    %v761 = vld [vmem:[#allocation7 + $0x10] sm:$0xff]
    %v762 = vld [vmem:[#allocation7 + $0x18] sm:$0xff]
    %v763 = vld [vmem:[#allocation7 + $0x20] sm:$0xff]
    %v764 = vld [vmem:[#allocation7 + $0x28] sm:$0xff]
    %v765 = vld [vmem:[#allocation7 + $0x30] sm:$0xff]
    %v766 = vld [vmem:[#allocation7 + $0x38] sm:$0xff]
    %v767 = vld [vmem:[#allocation7 + $0x40] sm:$0xff]
    %v768 = vld [vmem:[#allocation7 + $0x48] sm:$0xff]
    %v769 = vld [vmem:[#allocation7 + $0x50] sm:$0xff]
    %v770 = vld [vmem:[#allocation7 + $0x58] sm:$0xff]
    %v771 = vld [vmem:[#allocation7 + $0x60] sm:$0xff]
    %v772 = vld [vmem:[#allocation7 + $0x68] sm:$0xff]
    %v773 = vld [vmem:[#allocation7 + $0x70] sm:$0xff]
    %v774 = vld [vmem:[#allocation7 + $0x78] sm:$0xff]
    %v775 = vld [vmem:[#allocation7 + $0x80] sm:$0xff]
    %v776 = vld [vmem:[#allocation7 + $0x88] sm:$0xff]
    %v777 = vld [vmem:[#allocation7 + $0x90] sm:$0xff]
    %v778 = vld [vmem:[#allocation7 + $0x98] sm:$0xff]
    %v779 = vld [vmem:[#allocation7 + $0xa0] sm:$0xff]
    %v780 = vld [vmem:[#allocation7 + $0xa8] sm:$0xff]
    %v781 = vld [vmem:[#allocation7 + $0xb0] sm:$0xff]
    %v782 = vld [vmem:[#allocation7 + $0xb8] sm:$0xff]
    %v783 = vld [vmem:[#allocation7 + $0xc0] sm:$0xff]
    %v784 = vld [vmem:[#allocation7 + $0xc8] sm:$0xff]
    %v785 = vld [vmem:[#allocation7 + $0xd0] sm:$0xff]
    %v786 = vld [vmem:[#allocation7 + $0xd8] sm:$0xff]
    %v787 = vld [vmem:[#allocation7 + $0xe0] sm:$0xff]
    %v788 = vld [vmem:[#allocation7 + $0xe8] sm:$0xff]
    %v789 = vld [vmem:[#allocation7 + $0xf0] sm:$0xff]
    %v790 = vld [vmem:[#allocation7 + $0xf8] sm:$0xff]
    %v791 = vld [vmem:[#allocation7 + $0x100] sm:$0xff]
    %v792 = vld [vmem:[#allocation7 + $0x108] sm:$0xff]
    %v793 = vld [vmem:[#allocation7 + $0x110] sm:$0xff]
    %v794 = vld [vmem:[#allocation7 + $0x118] sm:$0xff]
    %v795 = vld [vmem:[#allocation7 + $0x120] sm:$0xff]
    %v796 = vld [vmem:[#allocation7 + $0x128] sm:$0xff]
    %v797 = vld [vmem:[#allocation7 + $0x130] sm:$0xff]
    %v798 = vld [vmem:[#allocation7 + $0x138] sm:$0xff]
    %v799 = vld [vmem:[#allocation7 + $0x140] sm:$0xff]
    %v800 = vld [vmem:[#allocation7 + $0x148] sm:$0xff]
    %v801 = vld [vmem:[#allocation7 + $0x150] sm:$0xff]
    %v802 = vld [vmem:[#allocation7 + $0x158] sm:$0xff]
    %v803 = vld [vmem:[#allocation7 + $0x160] sm:$0xff]
    %v804 = vld [vmem:[#allocation7 + $0x168] sm:$0xff]
    %v805 = vld [vmem:[#allocation7 + $0x170] sm:$0xff]
    %v806 = vld [vmem:[#allocation7 + $0x178] sm:$0xff]
    %v807 = vld [vmem:[#allocation7 + $0x180] sm:$0xff]
    %v808 = vld [vmem:[#allocation7 + $0x188] sm:$0xff]
    %v809 = vld [vmem:[#allocation7 + $0x190] sm:$0xff]
    %v810 = vld [vmem:[#allocation7 + $0x198] sm:$0xff]
    %v811 = vld [vmem:[#allocation7 + $0x1a0] sm:$0xff]
    %v812 = vld [vmem:[#allocation7 + $0x1a8] sm:$0xff]
    %v813 = vld [vmem:[#allocation7 + $0x1b0] sm:$0xff]
    %v814 = vld [vmem:[#allocation7 + $0x1b8] sm:$0xff]
    %v815 = vld [vmem:[#allocation7 + $0x1c0] sm:$0xff]
    %v816 = vld [vmem:[#allocation7 + $0x1c8] sm:$0xff]
    %v817 = vld [vmem:[#allocation7 + $0x1d0] sm:$0xff]
    %v818 = vld [vmem:[#allocation7 + $0x1d8] sm:$0xff]
    %v819 = vld [vmem:[#allocation7 + $0x1e0] sm:$0xff]
    %v820 = vld [vmem:[#allocation7 + $0x1e8] sm:$0xff]
    %v821 = vld [vmem:[#allocation7 + $0x1f0] sm:$0xff]
    %v822 = vld [vmem:[#allocation7 + $0x1f8] sm:$0xff]
    %v823 = vld [vmem:[#allocation7 + $0x200] sm:$0xff]
    %v824 = vld [vmem:[#allocation7 + $0x208] sm:$0xff]
    %v825 = vld [vmem:[#allocation7 + $0x210] sm:$0xff]
    %v826 = vld [vmem:[#allocation7 + $0x218] sm:$0xff]
    %v827 = vld [vmem:[#allocation7 + $0x220] sm:$0xff]
    %v828 = vld [vmem:[#allocation7 + $0x228] sm:$0xff]
    %v829 = vld [vmem:[#allocation7 + $0x230] sm:$0xff]
    %v830 = vld [vmem:[#allocation7 + $0x238] sm:$0xff]
    %v831 = vld [vmem:[#allocation7 + $0x240] sm:$0xff]
    %v832 = vld [vmem:[#allocation7 + $0x248] sm:$0xff]
    %v833 = vld [vmem:[#allocation7 + $0x250] sm:$0xff]
    %v834 = vld [vmem:[#allocation7 + $0x258] sm:$0xff]
    %v835 = vld [vmem:[#allocation7 + $0x260] sm:$0xff]
    %v836 = vld [vmem:[#allocation7 + $0x268] sm:$0xff]
    %v837 = vld [vmem:[#allocation7 + $0x270] sm:$0xff]
    %v838 = vld [vmem:[#allocation7 + $0x278] sm:$0xff]
    %v839 = vld [vmem:[%s4] sm:$0x1]
    %v841 = vlaneseq
    %v842 = vshrl.u32 %v841, 7
    %v843 = vsub.s32 0, %v842
    %v844 = vrot.slane %v839, %v843
    %846 = vmatprep.subr.mxu0 0.0
    %847 = vmatpush1.msra.mxu0 %v759
    %848 = vmatprep.subr.mxu0 0.0
    %849 = vmatpush1.msra.mxu0 %v760
    %850 = vmatprep.subr.mxu0 0.0
    %851 = vmatpush1.msra.mxu0 %v761
    %852 = vmatprep.subr.mxu0 0.0
    %853 = vmatpush1.msra.mxu0 %v762
    %854 = vmatprep.subr.mxu0 0.0
    %855 = vmatpush1.msra.mxu0 %v763
    %856 = vmatprep.subr.mxu0 0.0
    %857 = vmatpush1.msra.mxu0 %v764
    %858 = vmatprep.subr.mxu0 0.0
    %859 = vmatpush1.msra.mxu0 %v765
    %860 = vmatprep.subr.mxu0 0.0
    %861 = vmatpush1.msra.mxu0 %v766
    %862 = vmatprep.subr.mxu0 0.0
    %863 = vmatpush1.msra.mxu0 %v767
    %864 = vmatprep.subr.mxu0 0.0
    %865 = vmatpush1.msra.mxu0 %v768
    %866 = vmatprep.subr.mxu0 0.0
    %867 = vmatpush1.msra.mxu0 %v769
    %868 = vmatprep.subr.mxu0 0.0
    %869 = vmatpush1.msra.mxu0 %v770
    %870 = vmatprep.subr.mxu0 0.0
    %871 = vmatpush1.msra.mxu0 %v771
    %872 = vmatprep.subr.mxu0 0.0
    %873 = vmatpush1.msra.mxu0 %v772
    %874 = vmatprep.subr.mxu0 0.0
    %875 = vmatpush1.msra.mxu0 %v773
    %876 = vmatprep.subr.mxu0 0.0
    %877 = vmatpush1.msra.mxu0 %v774
    %878 = vmatprep.subr.mxu0 0.0
    %879 = vmatpush1.msra.mxu0 %v775
    %880 = vmatprep.subr.mxu0 0.0
    %881 = vmatpush1.msra.mxu0 %v776
    %882 = vmatprep.subr.mxu0 0.0
    %883 = vmatpush1.msra.mxu0 %v777
    %884 = vmatprep.subr.mxu0 0.0
    %885 = vmatpush1.msra.mxu0 %v778
    %886 = vmatprep.subr.mxu0 0.0
    %887 = vmatpush1.msra.mxu0 %v779
    %888 = vmatprep.subr.mxu0 0.0
    %889 = vmatpush1.msra.mxu0 %v780
    %890 = vmatprep.subr.mxu0 0.0
    %891 = vmatpush1.msra.mxu0 %v781
    %892 = vmatprep.subr.mxu0 0.0
    %893 = vmatpush1.msra.mxu0 %v782
    %894 = vmatprep.subr.mxu0 0.0
    %895 = vmatpush1.msra.mxu0 %v783
    %896 = vmatprep.subr.mxu0 0.0
    %897 = vmatpush1.msra.mxu0 %v784
    %898 = vmatprep.subr.mxu0 0.0
    %899 = vmatpush1.msra.mxu0 %v785
    %900 = vmatprep.subr.mxu0 0.0
    %901 = vmatpush1.msra.mxu0 %v786
    %902 = vmatprep.subr.mxu0 0.0
    %903 = vmatpush1.msra.mxu0 %v787
    %904 = vmatprep.subr.mxu0 0.0
    %905 = vmatpush1.msra.mxu0 %v788
    %906 = vmatprep.subr.mxu0 0.0
    %907 = vmatpush1.msra.mxu0 %v789
    %908 = vmatprep.subr.mxu0 0.0
    %909 = vmatpush1.msra.mxu0 %v790
    %910 = vmatprep.mubr.f32.mxu0 %v755
    %911 = vmatmul.mubr.f32.gmra.mrb[0].mxu0 %v754
    %v912 = vpop.f32.mrb[0].mxu0
    %v913 = vadd.f32 %v844, %v912
    %v914 = vpop.f32.mrb[0].mxu0
    %915 = vdwg.mxu0
    %916 = vmatprep.subr.mxu0 0.0
    %917 = vmatpush1.msra.mxu0 %v791
    %918 = vmatprep.subr.mxu0 0.0
    %919 = vmatpush1.msra.mxu0 %v792
    %920 = vmatprep.subr.mxu0 0.0
    %921 = vmatpush1.msra.mxu0 %v793
    %922 = vmatprep.subr.mxu0 0.0
    %923 = vmatpush1.msra.mxu0 %v794
    %924 = vmatprep.subr.mxu0 0.0
    %925 = vmatpush1.msra.mxu0 %v795
    %926 = vmatprep.subr.mxu0 0.0
    %927 = vmatpush1.msra.mxu0 %v796
    %928 = vmatprep.subr.mxu0 0.0
    %929 = vmatpush1.msra.mxu0 %v797
    %930 = vmatprep.subr.mxu0 0.0
    %931 = vmatpush1.msra.mxu0 %v798
    %932 = vmatprep.subr.mxu0 0.0
    %933 = vmatpush1.msra.mxu0 %v799
    %934 = vmatprep.subr.mxu0 0.0
    %935 = vmatpush1.msra.mxu0 %v800
    %936 = vmatprep.subr.mxu0 0.0
    %937 = vmatpush1.msra.mxu0 %v801
    %938 = vmatprep.subr.mxu0 0.0
    %939 = vmatpush1.msra.mxu0 %v802
    %940 = vmatprep.subr.mxu0 0.0
    %941 = vmatpush1.msra.mxu0 %v803
    %942 = vmatprep.subr.mxu0 0.0
    %943 = vmatpush1.msra.mxu0 %v804
    %944 = vmatprep.subr.mxu0 0.0
    %945 = vmatpush1.msra.mxu0 %v805
    %946 = vmatprep.subr.mxu0 0.0
    %947 = vmatpush1.msra.mxu0 %v806
    %948 = vmatprep.subr.mxu0 0.0
    %949 = vmatpush1.msra.mxu0 %v807
    %950 = vmatprep.subr.mxu0 0.0
    %951 = vmatpush1.msra.mxu0 %v808
    %952 = vmatprep.subr.mxu0 0.0
    %953 = vmatpush1.msra.mxu0 %v809
    %954 = vmatprep.subr.mxu0 0.0
    %955 = vmatpush1.msra.mxu0 %v810
    %956 = vmatprep.subr.mxu0 0.0
    %957 = vmatpush1.msra.mxu0 %v811
    %958 = vmatprep.subr.mxu0 0.0
    %959 = vmatpush1.msra.mxu0 %v812
    %960 = vmatprep.subr.mxu0 0.0
    %961 = vmatpush1.msra.mxu0 %v813
    %962 = vmatprep.subr.mxu0 0.0
    %963 = vmatpush1.msra.mxu0 %v814
    %964 = vmatprep.subr.mxu0 0.0
    %965 = vmatpush1.msra.mxu0 %v815
    %966 = vmatprep.subr.mxu0 0.0
    %967 = vmatpush1.msra.mxu0 %v816
    %968 = vmatprep.subr.mxu0 0.0
    %969 = vmatpush1.msra.mxu0 %v817
    %970 = vmatprep.subr.mxu0 0.0
    %971 = vmatpush1.msra.mxu0 %v818
    %972 = vmatprep.subr.mxu0 0.0
    %973 = vmatpush1.msra.mxu0 %v819
    %974 = vmatprep.subr.mxu0 0.0
    %975 = vmatpush1.msra.mxu0 %v820
    %976 = vmatprep.subr.mxu0 0.0
    %977 = vmatpush1.msra.mxu0 %v821
    %978 = vmatprep.subr.mxu0 0.0
    %979 = vmatpush1.msra.mxu0 %v822
    %980 = vmatprep.mubr.f32.mxu0 %v757
    %981 = vmatmul.mubr.f32.gmra.mrb[0].mxu0 %v756
    %v982 = vpop.f32.mrb[0].mxu0
    %v983 = vadd.f32 %v913, %v982
    %v984 = vpop.f32.mrb[0].mxu0
    %985 = vdwg.mxu0
    %986 = vmatprep.subr.mxu0 0.0
    %987 = vmatpush1.msra.mxu0 %v823
    %988 = vmatprep.subr.mxu0 0.0
    %989 = vmatpush1.msra.mxu0 %v824
    %990 = vmatprep.subr.mxu0 0.0
    %991 = vmatpush1.msra.mxu0 %v825
    %992 = vmatprep.subr.mxu0 0.0
    %993 = vmatpush1.msra.mxu0 %v826
    %994 = vmatprep.subr.mxu0 0.0
    %995 = vmatpush1.msra.mxu0 %v827
    %996 = vmatprep.subr.mxu0 0.0
    %997 = vmatpush1.msra.mxu0 %v828
    %998 = vmatprep.subr.mxu0 0.0
    %999 = vmatpush1.msra.mxu0 %v829
    %1000 = vmatprep.subr.mxu0 0.0
    %1001 = vmatpush1.msra.mxu0 %v830
    %1002 = vmatprep.subr.mxu0 0.0
    %1003 = vmatpush1.msra.mxu0 %v831
    %1004 = vmatprep.subr.mxu0 0.0
    %1005 = vmatpush1.msra.mxu0 %v832
    %1006 = vmatprep.subr.mxu0 0.0
    %1007 = vmatpush1.msra.mxu0 %v833
    %1008 = vmatprep.subr.mxu0 0.0
    %1009 = vmatpush1.msra.mxu0 %v834
    %1010 = vmatprep.subr.mxu0 0.0
    %1011 = vmatpush1.msra.mxu0 %v835
    %1012 = vmatprep.subr.mxu0 0.0
    %1013 = vmatpush1.msra.mxu0 %v836
    %1014 = vmatprep.subr.mxu0 0.0
    %1015 = vmatpush1.msra.mxu0 %v837
    %1016 = vmatprep.subr.mxu0 0.0
    %1017 = vmatpush1.msra.mxu0 %v838
    %1018 = vmatprep.subr.mxu0 0.0
    %1019 = vmatpush1.msra.mxu0 0.0
    %1020 = vmatprep.subr.mxu0 0.0
    %1021 = vmatpush1.msra.mxu0 0.0
    %1022 = vmatprep.subr.mxu0 0.0
    %1023 = vmatpush1.msra.mxu0 0.0
    %1024 = vmatprep.subr.mxu0 0.0
    %1025 = vmatpush1.msra.mxu0 0.0
    %1026 = vmatprep.subr.mxu0 0.0
    %1027 = vmatpush1.msra.mxu0 0.0
    %1028 = vmatprep.subr.mxu0 0.0
    %1029 = vmatpush1.msra.mxu0 0.0
    %1030 = vmatprep.subr.mxu0 0.0
    %1031 = vmatpush1.msra.mxu0 0.0
    %1032 = vmatprep.subr.mxu0 0.0
    %1033 = vmatpush1.msra.mxu0 0.0
    %1034 = vmatprep.subr.mxu0 0.0
    %1035 = vmatpush1.msra.mxu0 0.0
    %1036 = vmatprep.subr.mxu0 0.0
    %1037 = vmatpush1.msra.mxu0 0.0
    %1038 = vmatprep.subr.mxu0 0.0
    %1039 = vmatpush1.msra.mxu0 0.0
    %1040 = vmatprep.subr.mxu0 0.0
    %1041 = vmatpush1.msra.mxu0 0.0
    %1042 = vmatprep.subr.mxu0 0.0
    %1043 = vmatpush1.msra.mxu0 0.0
    %1044 = vmatprep.subr.mxu0 0.0
    %1045 = vmatpush1.msra.mxu0 0.0
    %1046 = vmatprep.subr.mxu0 0.0
    %1047 = vmatpush1.msra.mxu0 0.0
    %1048 = vmatprep.subr.mxu0 0.0
    %1049 = vmatpush1.msra.mxu0 0.0
    %1050 = vmatprep.mubr.f32.mxu0 0.0
    %1051 = vmatmul.mubr.f32.gmra.mrb[0].mxu0 %v758
    %v1052 = vpop.f32.mrb[0].mxu0
    %v1053 = vadd.f32 %v983, %v1052
    %v1054 = vpop.f32.mrb[0].mxu0
    %1055 = vdwg.mxu0
    %1056 = vst [vmem:[#allocation8] sm:$0xff] %v1053
    // Predicated region
    $region34: #{tpu_custom_call.1} parent=1 // pred_check
      _
    $region35: #{tpu_custom_call.1} parent=1 // pred_check_branch
      %1058 = sbr.rel (0) target = $region37
    $region36: #{tpu_custom_call.1} parent=1 // pred_region
      %s1060 = ssub.s32 128, 128
      %1061 = vsyncadd [#allocation4], %s1060
      %s1063 = sshll.u32 [#allocation8], 4
      %s1064 = int_to_ptr.vmem [resolvable:$true] %s1063
      %1066 = dma.vmem_to_hbm [thread:$0]  %s1064, 128, %s5, [#allocation4]
    $region37: #{tpu_custom_call.1} parent=1 // pred_fallthru
      _
    // Predicated region
    $region38: #{tpu_custom_call.1} parent=1 // pred_check
      _
    $region39: #{tpu_custom_call.1} parent=1 // pred_check_branch
      %1068 = sbr.rel (0) target = $region41
    $region40: #{tpu_custom_call.1} parent=1 // pred_region
      %1069 = dma.done [#allocation4], 128
    $region41: #{tpu_custom_call.1} parent=1 // pred_fallthru
      _
    %1070 = vsyncpa [#allocation3], 1
    %1071 = vsyncpa [#allocation6], 1
    %1072 = vsyncpa [#allocation4], 1

</llo_original>
